<compile_context>
chip_gen: v7x
topology: tpu7x:2x2x1
jax: 0.10.0
libtpu: 0.0.40
codegen_flags: <defaults>
</compile_context>

<pallas_src>
import functools

import jax
import jax.numpy as jnp
from jax import lax
from jax.experimental import pallas as pl
from jax.experimental.pallas import tpu as pltpu

# PreferenceModel defaults
NOISE_PROB = 0.0
DISCOUNT = 1.0
THRESHOLD = 50.0

STATS_W = 128  # lane-dense width of the per-block partial-sum row


def _softplus(x):
    # stable log(1 + exp(x)); exact enough in f32 for |x| <= THRESHOLD
    return jnp.maximum(x, 0.0) + jnp.log(1.0 + jnp.exp(-jnp.abs(x)))


def _bce_from_return_diff(diff, prefs):
    """BCE(P(frag1 preferred), prefs) computed from the clipped return difference.

    For noise_prob == 0 the probability is sigmoid(-diff), so the BCE is written in
    log space (softplus form), which is stable at the +/-THRESHOLD clip boundary
    where sigmoid rounds to exactly 0/1 in f32.  With noise mixing the log-space
    rewrite no longer applies, so mix in probability space (parity with PyTorch).
    """
    if NOISE_PROB == 0.0:
        return prefs * _softplus(diff) + (1.0 - prefs) * _softplus(-diff)
    p = NOISE_PROB * 0.5 + (1.0 - NOISE_PROB) / (1.0 + jnp.exp(diff))
    return -(prefs * jnp.log(p) + (1.0 - prefs) * jnp.log(1.0 - p))


def _ce_reward_loss_kernel(
    f1_ref, f2_ref,    # (tb, T, D) native dtype: fragment-1 / fragment-2 features
    w1_ref, b1_ref,    # (D, H) bf16, (1, H) f32
    w2_ref,            # (1, H) f32   (b2 cancels in the return diff -> not passed)
    disc_ref,          # (1, T) f32 discount factors (unused when DISCOUNT == 1)
    prefs_ref,         # (tb, 1) f32 target preferences for this block
    gt1_ref, gt2_ref,  # (tb, T) f32 ground-truth rewards (time on lanes)
    stats_ref,         # (1, 1, STATS_W) f32: [bce_sum, correct_count, gt_bce_sum, 0..]
    probs_ref,         # (tb, 1) f32 predicted P(frag1 preferred)
    *, tb, t,
):
    w1 = w1_ref[...]
    b1 = b1_ref[...]

    # --- reward-net hidden layer: one bf16 MXU pass per fragment half ----------
    # (contiguous halves: no interleaved reshape/slice relayout, any T is fine)
    def hidden(fref):
        x = fref[...].reshape(tb * t, -1).astype(jnp.bfloat16)
        return jnp.tanh(jnp.dot(x, w1, preferred_element_type=jnp.float32) + b1)

    d = (hidden(f2_ref) - hidden(f1_ref)).reshape(tb, t, -1)      # (tb, t, H) f32

    # --- discounted per-pair return difference ---------------------------------
    # The (H,1) output layer is linear, so it is deferred until after the time
    # reduction.  Pairs stay on sublanes throughout: the w2 contraction is a lane
    # reduce on a (tb, H) tile, no full-tile transpose.
    if DISCOUNT != 1.0:
        d = disc_ref[...][:, :, None] * d                         # (1, t, 1) bcast
    g = jnp.sum(d, axis=1)                                        # (tb, H)
    diff = jnp.sum(g * w2_ref[...], axis=1, keepdims=True)        # (tb, 1)
    diff = jnp.clip(diff, -THRESHOLD, THRESHOLD)

    # --- PreferenceModel.probability (with noise mixing) -----------------------
    model_prob = 1.0 / (1.0 + jnp.exp(diff))
    probs = NOISE_PROB * 0.5 + (1.0 - NOISE_PROB) * model_prob    # (tb, 1)
    probs_ref[...] = probs

    prefs = prefs_ref[...]                                        # (tb, 1)

    # --- partial sums for loss / accuracy / gt_reward_loss ---------------------
    bce_sum = jnp.sum(_bce_from_return_diff(diff, prefs))
    correct = (probs > 0.5) == (prefs > 0.5)
    correct_cnt = jnp.sum(correct.astype(jnp.float32))

    gt_d = gt2_ref[...] - gt1_ref[...]                            # (tb, t)
    if DISCOUNT != 1.0:
        gt_d = disc_ref[...] * gt_d
    gt_diff = jnp.clip(jnp.sum(gt_d, axis=1, keepdims=True), -THRESHOLD, THRESHOLD)
    gt_bce_sum = jnp.sum(_bce_from_return_diff(gt_diff, prefs))

    # pack the three scalar partials into one lane-dense row (single unmasked store)
    lane = lax.broadcasted_iota(jnp.int32, (1, 1, STATS_W), 2)
    stats_ref[...] = jnp.where(
        lane == 0, bce_sum,
        jnp.where(lane == 1, correct_cnt,
                  jnp.where(lane == 2, gt_bce_sum, 0.0)))


def _choose_pairs_per_block(B, T, D, itemsize, tile_bytes=1 << 20):
    """Pick the fragment-pairs-per-block tile size.

    Targets ~1 MiB per fragment tile per buffer (amortizes per-grid-step overhead),
    prefers nb = B // tb >= 2 so the "parallel" grid axis can feed both v7x
    TensorCores, and keeps tb sublane-aligned (multiple of 8, or == B) so the 2-D
    refs (prefs / gt / probs) have tile-legal BlockSpecs.
    """
    cap = max(8, min(512, (tile_bytes // max(1, T * D * itemsize)) // 8 * 8))
    best_any = None
    best_multi = None
    for tb in range(1, min(B, cap) + 1):
        if B % tb:
            continue
        if tb % 8 != 0 and tb != B:
            continue
        best_any = tb
        if B // tb >= 2:
            best_multi = tb
    if best_multi is not None:
        return best_multi
    if best_any is not None:
        return best_any
    return B


def cross_entropy_reward_loss(frag1_feats, frag2_feats, gt_rews1, gt_rews2,
                              preferences, params, *, pairs_per_block=None):
    """Returns (loss, metrics, probs) like LossAndMetrics + predicted probabilities.

    frag*_feats may be f32 or bf16; the first-layer matmul runs in bf16 either way
    (documented numerics contract vs the f32 PyTorch module).
    """
    B, T, D = frag1_feats.shape
    H = params["w1"].shape[1]
    itemsize = jnp.dtype(frag1_feats.dtype).itemsize

    if pairs_per_block is None:
        pairs_per_block = _choose_pairs_per_block(B, T, D, itemsize)
    tb = pairs_per_block
    # TODO(synk): mask the tail block instead of requiring divisibility.
    assert B % tb == 0, "pairs_per_block must divide the number of fragment pairs"
    nb = B // tb

    # frag features are passed as-is (no wrapper concat/reshape/cast HBM pass);
    # the bf16 cast happens in-kernel.  If the upstream featurizer can emit bf16,
    # pass bf16 here and the activation DMA halves again.
    w1 = params["w1"].astype(jnp.bfloat16)                         # (D, H)
    b1 = params["b1"].astype(jnp.float32).reshape(1, H)
    w2 = params["w2"].astype(jnp.float32).reshape(1, H)
    # b2 intentionally not passed: it cancels exactly in (return2 - return1).

    disc = (DISCOUNT ** jnp.arange(T, dtype=jnp.float32)).reshape(1, T)
    prefs = preferences.astype(jnp.float32).reshape(B, 1)
    gt1 = gt_rews1.astype(jnp.float32)                             # (B, T), time on lanes
    gt2 = gt_rews2.astype(jnp.float32)

    kernel = functools.partial(_ce_reward_loss_kernel, tb=tb, t=T)

    # VMEM budget: double-buffered frag tiles + resident weights + gt/pref tiles +
    # live f32 hidden activations.  v7x has half the physical VMEM (64 MiB) and a
    # 32 MiB scoped default, so clamp with headroom instead of assuming 128 MiB.
    vmem_bytes = (
        2 * 2 * tb * T * D * itemsize          # 2 frag refs x double buffer
        + 2 * (D * H * 2 + 2 * H * 4 + T * 4)  # w1/b1/w2/disc (resident, 2 bufs)
        + 2 * 2 * 2 * tb * T * 4               # gt reward tiles
        + 2 * 2 * 2 * tb * 4                   # prefs / probs columns
        + 4 * tb * T * H * 4                   # live f32 hidden activations
    )
    vmem_limit = min(max(int(1.5 * vmem_bytes), 32 << 20), 48 << 20)

    cost = pl.CostEstimate(
        flops=4 * B * T * D * H + 8 * B * T * H,      # two bf16 matmuls + epilogue
        transcendentals=2 * B * T * H + 4 * B,         # tanh + sigmoid/softplus exps
        bytes_accessed=(2 * B * T * D * itemsize       # frag features
                        + 2 * B * T * 4                # gt rewards
                        + D * H * 2 + 3 * H * 4        # weights
                        + B * 8 + nb * STATS_W * 4),   # prefs + probs + stats
    )

    stats, probs = pl.pallas_call(
        kernel,
        grid=(nb,),
        in_specs=[
            pl.BlockSpec((tb, T, D), lambda i: (i, 0, 0)),   # frag1 features
            pl.BlockSpec((tb, T, D), lambda i: (i, 0, 0)),   # frag2 features
            pl.BlockSpec((D, H), lambda i: (0, 0)),          # w1 (resident)
            pl.BlockSpec((1, H), lambda i: (0, 0)),          # b1
            pl.BlockSpec((1, H), lambda i: (0, 0)),          # w2 (row)
            pl.BlockSpec((1, T), lambda i: (0, 0)),          # discounts
            pl.BlockSpec((tb, 1), lambda i: (i, 0)),         # preferences (column)
            pl.BlockSpec((tb, T), lambda i: (i, 0)),         # gt rewards frag1
            pl.BlockSpec((tb, T), lambda i: (i, 0)),         # gt rewards frag2
        ],
        out_specs=(
            pl.BlockSpec((1, 1, STATS_W), lambda i: (i, 0, 0)),  # per-block partials
            pl.BlockSpec((tb, 1), lambda i: (i, 0)),             # per-pair probs
        ),
        out_shape=(
            jax.ShapeDtypeStruct((nb, 1, STATS_W), jnp.float32),
            jax.ShapeDtypeStruct((B, 1), jnp.float32),
        ),
        compiler_params=pltpu.CompilerParams(
            # blocks write disjoint output slices -> safe to shard across TensorCores
            dimension_semantics=("parallel",),
            vmem_limit_bytes=vmem_limit,
        ),
        cost_estimate=cost,
    )(frag1_feats, frag2_feats, w1, b1, w2, disc, prefs, gt1, gt2)

    inv_b = 1.0 / B
    loss = jnp.sum(stats[:, 0, 0]) * inv_b
    metrics = {
        "accuracy": jnp.sum(stats[:, 0, 1]) * inv_b,
        "gt_reward_loss": jnp.sum(stats[:, 0, 2]) * inv_b,
    }
    return loss, metrics, probs.reshape(B)


def _reference(frag1, frag2, gt1, gt2, preferences, params,
               matmul_dtype=jnp.float32):
    """Pure-JAX reference mirroring the PyTorch semantics.

    matmul_dtype=bf16 matches the kernel's first-layer precision exactly.
    """
    w1 = params["w1"].astype(matmul_dtype)

    def reward(x):
        h = jnp.tanh(jnp.dot(x.astype(matmul_dtype), w1,
                             preferred_element_type=jnp.float32) + params["b1"])
        return (jnp.dot(h, params["w2"]) + params["b2"])[..., 0]   # (B, T)

    r1 = reward(frag1)
    r2 = reward(frag2)
    disc = DISCOUNT ** jnp.arange(frag1.shape[1], dtype=jnp.float32)
    diff = jnp.clip(jnp.sum(disc * (r2 - r1), axis=1), -THRESHOLD, THRESHOLD)
    probs = NOISE_PROB * 0.5 + (1.0 - NOISE_PROB) / (1.0 + jnp.exp(diff))
    prefs = preferences.astype(jnp.float32)
    bce = lambda q: jnp.mean(-(prefs * jnp.log(q) + (1 - prefs) * jnp.log(1 - q)))
    loss = bce(probs)
    acc = jnp.mean(((probs > 0.5) == (prefs > 0.5)).astype(jnp.float32))
    gt_diff = jnp.clip(jnp.sum(disc * (gt2 - gt1), axis=1), -THRESHOLD, THRESHOLD)
    gt_probs = NOISE_PROB * 0.5 + (1.0 - NOISE_PROB) / (1.0 + jnp.exp(gt_diff))
    return loss, acc, bce(gt_probs), probs


if __name__ == "__main__":
    B, T, D, H = 16, 8, 128, 128   # pairs, fragment length, feature dim, hidden dim

    key = jax.random.PRNGKey(0)
    k1, k2, k3, k4, k5, k6, k7, k8 = jax.random.split(key, 8)

    # deterministic synthetic "transition features" (obs/act already featurized)
    frag1_feats = jax.random.normal(k1, (B, T, D), jnp.float32)
    frag2_feats = jax.random.normal(k2, (B, T, D), jnp.float32)
    gt_rews1 = jax.random.normal(k3, (B, T), jnp.float32)
    gt_rews2 = jax.random.normal(k4, (B, T), jnp.float32)
    preferences = jnp.tile(
        jnp.array([1.0, 0.0, 1.0, 0.5, 0.0, 1.0, 0.0, 0.5], jnp.float32), 2)

    # deterministic reward-net params (small 2-layer MLP reward model)
    params = {
        "w1": jax.random.normal(k5, (D, H), jnp.float32) * (1.0 / jnp.sqrt(D)),
        "b1": jax.random.normal(k6, (1, H), jnp.float32) * 0.01,
        "w2": jax.random.normal(k7, (H, 1), jnp.float32) * (1.0 / jnp.sqrt(H)),
        "b2": jax.random.normal(k8, (1, 1), jnp.float32),  # cancels in the return diff
    }

    loss, metrics, probs = cross_entropy_reward_loss(
        frag1_feats, frag2_feats, gt_rews1, gt_rews2, preferences, params
    )
    jax.block_until_ready((loss, metrics, probs))

    # parity check vs a pure-JAX reference with the same bf16 first-layer matmul
    ref_loss, ref_acc, ref_gt_loss, ref_probs = _reference(
        frag1_feats, frag2_feats, gt_rews1, gt_rews2, preferences, params,
        matmul_dtype=jnp.bfloat16)
    assert jnp.allclose(loss, ref_loss, atol=1e-3, rtol=1e-3)
    assert jnp.allclose(metrics["accuracy"], ref_acc, atol=1e-6)
    assert jnp.allclose(metrics["gt_reward_loss"], ref_gt_loss, atol=1e-4, rtol=1e-4)
    assert jnp.allclose(probs, ref_probs, atol=1e-3, rtol=1e-3)

    # sanity check: bf16 quantization of the first layer stays small vs full-f32 math
    f32_loss, _, _, f32_probs = _reference(
        frag1_feats, frag2_feats, gt_rews1, gt_rews2, preferences, params,
        matmul_dtype=jnp.float32)
    assert jnp.allclose(probs, f32_probs, atol=5e-2)
    assert jnp.allclose(loss, f32_loss, atol=1e-1)

    print("KERNEL_OK")
</pallas_src>

<mosaic_0001>
module attributes {stable_mosaic.version = 11 : i64} {
  func.func @_ce_reward_loss_kernel(%arg0: i32, %arg1: memref<8x8x128xf32, #tpu.memory_space<vmem>>, %arg2: memref<8x8x128xf32, #tpu.memory_space<vmem>>, %arg3: memref<128x128xbf16, #tpu.memory_space<vmem>>, %arg4: memref<1x128xf32, #tpu.memory_space<vmem>>, %arg5: memref<1x128xf32, #tpu.memory_space<vmem>>, %arg6: memref<1x8xf32, #tpu.memory_space<vmem>>, %arg7: memref<8x1xf32, #tpu.memory_space<vmem>>, %arg8: memref<8x8xf32, #tpu.memory_space<vmem>>, %arg9: memref<8x8xf32, #tpu.memory_space<vmem>>, %arg10: memref<1x1x128xf32, #tpu.memory_space<vmem>>, %arg11: memref<8x1xf32, #tpu.memory_space<vmem>>) attributes {dimension_semantics = [#tpu.dimension_semantics<parallel>], iteration_bounds = array<i64: 2>, scalar_prefetch = 0 : i64, scratch_operands = 0 : i64, tpu.core_type = #tpu.core_type<tc>, window_params = [{transform_indices = @transform_0, window_bounds = array<i64: 8, 8, 128>}, {transform_indices = @transform_1, window_bounds = array<i64: 8, 8, 128>}, {pipeline_mode = #tpu.pipeline_mode<synchronous>, transform_indices = @transform_2, window_bounds = array<i64: 128, 128>}, {pipeline_mode = #tpu.pipeline_mode<synchronous>, transform_indices = @transform_3, window_bounds = array<i64: 1, 128>}, {pipeline_mode = #tpu.pipeline_mode<synchronous>, transform_indices = @transform_4, window_bounds = array<i64: 1, 128>}, {pipeline_mode = #tpu.pipeline_mode<synchronous>, transform_indices = @transform_5, window_bounds = array<i64: 1, 8>}, {transform_indices = @transform_6, window_bounds = array<i64: 8, 1>}, {transform_indices = @transform_7, window_bounds = array<i64: 8, 8>}, {transform_indices = @transform_8, window_bounds = array<i64: 8, 8>}, {transform_indices = @transform_9, window_bounds = array<i64: 1, 1, 128>}, {transform_indices = @transform_10, window_bounds = array<i64: 8, 1>}]} {
    %c0 = arith.constant 0 : index
    %c0_0 = arith.constant 0 : index
    %0 = vector.load %arg3[%c0, %c0_0] : memref<128x128xbf16, #tpu.memory_space<vmem>>, vector<128x128xbf16>
    %c0_1 = arith.constant 0 : index
    %c0_2 = arith.constant 0 : index
    %1 = vector.load %arg4[%c0_1, %c0_2] : memref<1x128xf32, #tpu.memory_space<vmem>>, vector<1x128xf32>
    %c0_3 = arith.constant 0 : index
    %c0_4 = arith.constant 0 : index
    %c0_5 = arith.constant 0 : index
    %2 = vector.load %arg2[%c0_3, %c0_4, %c0_5] : memref<8x8x128xf32, #tpu.memory_space<vmem>>, vector<8x8x128xf32>
    %3 = vector.shape_cast %2 : vector<8x8x128xf32> to vector<64x128xf32>
    %4 = arith.truncf %3 : vector<64x128xf32> to vector<64x128xbf16>
    %cst = arith.constant dense<0.000000e+00> : vector<64x128xf32>
    %5 = tpu.matmul %4, %0, %cst {dimension_numbers = #tpu.dot_dimension_numbers<[1], [0], [0], [1], [0, 0, 1, 1], [], []>} : vector<64x128xbf16>, vector<128x128xbf16>, vector<64x128xf32> -> vector<64x128xf32>
    %6 = vector.broadcast %1 : vector<1x128xf32> to vector<64x128xf32>
    %7 = arith.addf %5, %6 : vector<64x128xf32>
    %8 = math.tanh %7 : vector<64x128xf32>
    %c0_6 = arith.constant 0 : index
    %c0_7 = arith.constant 0 : index
    %c0_8 = arith.constant 0 : index
    %9 = vector.load %arg1[%c0_6, %c0_7, %c0_8] : memref<8x8x128xf32, #tpu.memory_space<vmem>>, vector<8x8x128xf32>
    %10 = vector.shape_cast %9 : vector<8x8x128xf32> to vector<64x128xf32>
    %11 = arith.truncf %10 : vector<64x128xf32> to vector<64x128xbf16>
    %cst_9 = arith.constant dense<0.000000e+00> : vector<64x128xf32>
    %12 = tpu.matmul %11, %0, %cst_9 {dimension_numbers = #tpu.dot_dimension_numbers<[1], [0], [0], [1], [0, 0, 1, 1], [], []>} : vector<64x128xbf16>, vector<128x128xbf16>, vector<64x128xf32> -> vector<64x128xf32>
    %13 = vector.broadcast %1 : vector<1x128xf32> to vector<64x128xf32>
    %14 = arith.addf %12, %13 : vector<64x128xf32>
    %15 = math.tanh %14 : vector<64x128xf32>
    %16 = arith.subf %8, %15 : vector<64x128xf32>
    %17 = vector.shape_cast %16 : vector<64x128xf32> to vector<8x8x128xf32>
    %cst_10 = arith.constant dense<0.000000e+00> : vector<8x128xf32>
    %18 = vector.multi_reduction <add>, %17, %cst_10 [1] : vector<8x8x128xf32> to vector<8x128xf32>
    %c0_11 = arith.constant 0 : index
    %c0_12 = arith.constant 0 : index
    %19 = vector.load %arg5[%c0_11, %c0_12] : memref<1x128xf32, #tpu.memory_space<vmem>>, vector<1x128xf32>
    %20 = vector.broadcast %19 : vector<1x128xf32> to vector<8x128xf32>
    %21 = arith.mulf %18, %20 : vector<8x128xf32>
    %cst_13 = arith.constant dense<0.000000e+00> : vector<8xf32>
    %22 = vector.multi_reduction <add>, %21, %cst_13 [1] : vector<8x128xf32> to vector<8xf32>
    %23 = vector.shape_cast %22 : vector<8xf32> to vector<8x1xf32>
    %cst_14 = arith.constant -5.000000e+01 : f32
    %cst_15 = arith.constant 5.000000e+01 : f32
    %24 = vector.broadcast %cst_14 : f32 to vector<8x1xf32>
    %25 = arith.maximumf %24, %23 : vector<8x1xf32>
    %26 = vector.broadcast %cst_15 : f32 to vector<8x1xf32>
    %27 = arith.minimumf %26, %25 : vector<8x1xf32>
    %28 = math.exp %27 : vector<8x1xf32>
    %cst_16 = arith.constant 1.000000e+00 : f32
    %29 = vector.broadcast %cst_16 : f32 to vector<8x1xf32>
    %30 = arith.addf %29, %28 : vector<8x1xf32>
    %cst_17 = arith.constant 1.000000e+00 : f32
    %31 = vector.broadcast %cst_17 : f32 to vector<8x1xf32>
    %32 = arith.divf %31, %30 : vector<8x1xf32>
    %cst_18 = arith.constant 1.000000e+00 : f32
    %33 = vector.broadcast %cst_18 : f32 to vector<8x1xf32>
    %34 = arith.mulf %33, %32 : vector<8x1xf32>
    %cst_19 = arith.constant 0.000000e+00 : f32
    %35 = vector.broadcast %cst_19 : f32 to vector<8x1xf32>
    %36 = arith.addf %35, %34 : vector<8x1xf32>
    %c0_20 = arith.constant 0 : index
    %c0_21 = arith.constant 0 : index
    %37 = vector.load %arg11[%c0_20, %c0_21] : memref<8x1xf32, #tpu.memory_space<vmem>>, vector<8x1xf32>
    tpu.vector_store %arg11[%c0_20, %c0_21], %36 {strides = array<i32>} : memref<8x1xf32, #tpu.memory_space<vmem>>, vector<8x1xf32>,
    %c0_22 = arith.constant 0 : index
    %c0_23 = arith.constant 0 : index
    %38 = vector.load %arg7[%c0_22, %c0_23] : memref<8x1xf32, #tpu.memory_space<vmem>>, vector<8x1xf32>
    %cst_24 = arith.constant 0.000000e+00 : f32
    %39 = vector.broadcast %cst_24 : f32 to vector<8x1xf32>
    %40 = arith.maximumf %27, %39 : vector<8x1xf32>
    %41 = math.absf %27 : vector<8x1xf32>
    %cst_25 = arith.constant 0.000000e+00 : f32
    %42 = vector.broadcast %cst_25 : f32 to vector<8x1xf32>
    %43 = arith.subf %42, %41 : vector<8x1xf32>
    %44 = math.exp %43 : vector<8x1xf32>
    %cst_26 = arith.constant 1.000000e+00 : f32
    %45 = vector.broadcast %cst_26 : f32 to vector<8x1xf32>
    %46 = arith.addf %45, %44 : vector<8x1xf32>
    %47 = math.log %46 : vector<8x1xf32>
    %48 = arith.addf %40, %47 : vector<8x1xf32>
    %49 = arith.mulf %38, %48 : vector<8x1xf32>
    %cst_27 = arith.constant 1.000000e+00 : f32
    %50 = vector.broadcast %cst_27 : f32 to vector<8x1xf32>
    %51 = arith.subf %50, %38 : vector<8x1xf32>
    %cst_28 = arith.constant 0.000000e+00 : f32
    %52 = vector.broadcast %cst_28 : f32 to vector<8x1xf32>
    %53 = arith.subf %52, %27 : vector<8x1xf32>
    %cst_29 = arith.constant 0.000000e+00 : f32
    %54 = vector.broadcast %cst_29 : f32 to vector<8x1xf32>
    %55 = arith.maximumf %53, %54 : vector<8x1xf32>
    %56 = math.absf %53 : vector<8x1xf32>
    %cst_30 = arith.constant 0.000000e+00 : f32
    %57 = vector.broadcast %cst_30 : f32 to vector<8x1xf32>
    %58 = arith.subf %57, %56 : vector<8x1xf32>
    %59 = math.exp %58 : vector<8x1xf32>
    %cst_31 = arith.constant 1.000000e+00 : f32
    %60 = vector.broadcast %cst_31 : f32 to vector<8x1xf32>
    %61 = arith.addf %60, %59 : vector<8x1xf32>
    %62 = math.log %61 : vector<8x1xf32>
    %63 = arith.addf %55, %62 : vector<8x1xf32>
    %64 = arith.mulf %51, %63 : vector<8x1xf32>
    %65 = arith.addf %49, %64 : vector<8x1xf32>
    %66 = vector.shape_cast %65 : vector<8x1xf32> to vector<1x8x1xf32>
    %cst_32 = arith.constant dense<0.000000e+00> : vector<1xf32>
    %67 = vector.multi_reduction <add>, %66, %cst_32 [1, 2] : vector<1x8x1xf32> to vector<1xf32>
    %68 = vector.shape_cast %67 : vector<1xf32> to vector<1x1x1xf32>
    %69 = vector.extract %68[0, 0, 0] : f32 from vector<1x1x1xf32>
    %cst_33 = arith.constant 5.000000e-01 : f32
    %70 = vector.broadcast %cst_33 : f32 to vector<8x1xf32>
    %71 = arith.cmpf ogt, %36, %70 : vector<8x1xf32>
    %cst_34 = arith.constant 5.000000e-01 : f32
    %72 = vector.broadcast %cst_34 : f32 to vector<8x1xf32>
    %73 = arith.cmpf ogt, %38, %72 : vector<8x1xf32>
    %74 = arith.xori %71, %73 : vector<8x1xi1>
    %cst_35 = arith.constant dense<true> : vector<8x1xi1>
    %75 = arith.xori %74, %cst_35 : vector<8x1xi1>
    %76 = arith.extui %75 : vector<8x1xi1> to vector<8x1xi32>
    %77 = arith.sitofp %76 : vector<8x1xi32> to vector<8x1xf32>
    %78 = vector.shape_cast %77 : vector<8x1xf32> to vector<1x8x1xf32>
    %cst_36 = arith.constant dense<0.000000e+00> : vector<1xf32>
    %79 = vector.multi_reduction <add>, %78, %cst_36 [1, 2] : vector<1x8x1xf32> to vector<1xf32>
    %80 = vector.shape_cast %79 : vector<1xf32> to vector<1x1x1xf32>
    %81 = vector.extract %80[0, 0, 0] : f32 from vector<1x1x1xf32>
    %c0_37 = arith.constant 0 : index
    %c0_38 = arith.constant 0 : index
    %82 = vector.load %arg9[%c0_37, %c0_38] : memref<8x8xf32, #tpu.memory_space<vmem>>, vector<8x8xf32>
    %c0_39 = arith.constant 0 : index
    %c0_40 = arith.constant 0 : index
    %83 = vector.load %arg8[%c0_39, %c0_40] : memref<8x8xf32, #tpu.memory_space<vmem>>, vector<8x8xf32>
    %84 = arith.subf %82, %83 : vector<8x8xf32>
    %cst_41 = arith.constant dense<0.000000e+00> : vector<8xf32>
    %85 = vector.multi_reduction <add>, %84, %cst_41 [1] : vector<8x8xf32> to vector<8xf32>
    %86 = vector.shape_cast %85 : vector<8xf32> to vector<8x1xf32>
    %cst_42 = arith.constant -5.000000e+01 : f32
    %cst_43 = arith.constant 5.000000e+01 : f32
    %87 = vector.broadcast %cst_42 : f32 to vector<8x1xf32>
    %88 = arith.maximumf %87, %86 : vector<8x1xf32>
    %89 = vector.broadcast %cst_43 : f32 to vector<8x1xf32>
    %90 = arith.minimumf %89, %88 : vector<8x1xf32>
    %cst_44 = arith.constant 0.000000e+00 : f32
    %91 = vector.broadcast %cst_44 : f32 to vector<8x1xf32>
    %92 = arith.maximumf %90, %91 : vector<8x1xf32>
    %93 = math.absf %90 : vector<8x1xf32>
    %cst_45 = arith.constant 0.000000e+00 : f32
    %94 = vector.broadcast %cst_45 : f32 to vector<8x1xf32>
    %95 = arith.subf %94, %93 : vector<8x1xf32>
    %96 = math.exp %95 : vector<8x1xf32>
    %cst_46 = arith.constant 1.000000e+00 : f32
    %97 = vector.broadcast %cst_46 : f32 to vector<8x1xf32>
    %98 = arith.addf %97, %96 : vector<8x1xf32>
    %99 = math.log %98 : vector<8x1xf32>
    %100 = arith.addf %92, %99 : vector<8x1xf32>
    %101 = arith.mulf %38, %100 : vector<8x1xf32>
    %cst_47 = arith.constant 1.000000e+00 : f32
    %102 = vector.broadcast %cst_47 : f32 to vector<8x1xf32>
    %103 = arith.subf %102, %38 : vector<8x1xf32>
    %cst_48 = arith.constant 0.000000e+00 : f32
    %104 = vector.broadcast %cst_48 : f32 to vector<8x1xf32>
    %105 = arith.subf %104, %90 : vector<8x1xf32>
    %cst_49 = arith.constant 0.000000e+00 : f32
    %106 = vector.broadcast %cst_49 : f32 to vector<8x1xf32>
    %107 = arith.maximumf %105, %106 : vector<8x1xf32>
    %108 = math.absf %105 : vector<8x1xf32>
    %cst_50 = arith.constant 0.000000e+00 : f32
    %109 = vector.broadcast %cst_50 : f32 to vector<8x1xf32>
    %110 = arith.subf %109, %108 : vector<8x1xf32>
    %111 = math.exp %110 : vector<8x1xf32>
    %cst_51 = arith.constant 1.000000e+00 : f32
    %112 = vector.broadcast %cst_51 : f32 to vector<8x1xf32>
    %113 = arith.addf %112, %111 : vector<8x1xf32>
    %114 = math.log %113 : vector<8x1xf32>
    %115 = arith.addf %107, %114 : vector<8x1xf32>
    %116 = arith.mulf %103, %115 : vector<8x1xf32>
    %117 = arith.addf %101, %116 : vector<8x1xf32>
    %118 = vector.shape_cast %117 : vector<8x1xf32> to vector<1x8x1xf32>
    %cst_52 = arith.constant dense<0.000000e+00> : vector<1xf32>
    %119 = vector.multi_reduction <add>, %118, %cst_52 [1, 2] : vector<1x8x1xf32> to vector<1xf32>
    %120 = vector.shape_cast %119 : vector<1xf32> to vector<1x1x1xf32>
    %121 = vector.extract %120[0, 0, 0] : f32 from vector<1x1x1xf32>
    %122 = tpu.iota {dimensions = array<i32: 2>} : vector<1x1x128xi32>
    %c0_i32 = arith.constant 0 : i32
    %123 = vector.broadcast %c0_i32 : i32 to vector<1x1x128xi32>
    %124 = arith.cmpi eq, %122, %123 : vector<1x1x128xi32>
    %c1_i32 = arith.constant 1 : i32
    %125 = vector.broadcast %c1_i32 : i32 to vector<1x1x128xi32>
    %126 = arith.cmpi eq, %122, %125 : vector<1x1x128xi32>
    %c2_i32 = arith.constant 2 : i32
    %127 = vector.broadcast %c2_i32 : i32 to vector<1x1x128xi32>
    %128 = arith.cmpi eq, %122, %127 : vector<1x1x128xi32>
    %cst_53 = arith.constant 0.000000e+00 : f32
    %129 = vector.broadcast %121 : f32 to vector<1x1x128xf32>
    %130 = vector.broadcast %cst_53 : f32 to vector<1x1x128xf32>
    %131 = arith.select %128, %129, %130 : vector<1x1x128xi1>, vector<1x1x128xf32>
    %132 = vector.broadcast %81 : f32 to vector<1x1x128xf32>
    %133 = arith.select %126, %132, %131 : vector<1x1x128xi1>, vector<1x1x128xf32>
    %134 = vector.broadcast %69 : f32 to vector<1x1x128xf32>
    %135 = arith.select %124, %134, %133 : vector<1x1x128xi1>, vector<1x1x128xf32>
    %c0_54 = arith.constant 0 : index
    %c0_55 = arith.constant 0 : index
    %c0_56 = arith.constant 0 : index
    %136 = vector.load %arg10[%c0_54, %c0_55, %c0_56] : memref<1x1x128xf32, #tpu.memory_space<vmem>>, vector<1x1x128xf32>
    tpu.vector_store %arg10[%c0_54, %c0_55, %c0_56], %135 {strides = array<i32>} : memref<1x1x128xf32, #tpu.memory_space<vmem>>, vector<1x1x128xf32>,
    return
  }
  func.func @transform_0(%arg0: i32) -> (i32, i32, i32) {
    %c0_i32 = arith.constant 0 : i32
    %c0_i32_0 = arith.constant 0 : i32
    %c0_i32_1 = arith.constant 0 : i32
    return %arg0, %c0_i32, %c0_i32_0 : i32, i32, i32
  }
  func.func @transform_1(%arg0: i32) -> (i32, i32, i32) {
    %c0_i32 = arith.constant 0 : i32
    %c0_i32_0 = arith.constant 0 : i32
    %c0_i32_1 = arith.constant 0 : i32
    return %arg0, %c0_i32, %c0_i32_0 : i32, i32, i32
  }
  func.func @transform_2(%arg0: i32) -> (i32, i32) {
    %c0_i32 = arith.constant 0 : i32
    %c0_i32_0 = arith.constant 0 : i32
    %c0_i32_1 = arith.constant 0 : i32
    return %c0_i32, %c0_i32_0 : i32, i32
  }
  func.func @transform_3(%arg0: i32) -> (i32, i32) {
    %c0_i32 = arith.constant 0 : i32
    %c0_i32_0 = arith.constant 0 : i32
    %c0_i32_1 = arith.constant 0 : i32
    return %c0_i32, %c0_i32_0 : i32, i32
  }
  func.func @transform_4(%arg0: i32) -> (i32, i32) {
    %c0_i32 = arith.constant 0 : i32
    %c0_i32_0 = arith.constant 0 : i32
    %c0_i32_1 = arith.constant 0 : i32
    return %c0_i32, %c0_i32_0 : i32, i32
  }
  func.func @transform_5(%arg0: i32) -> (i32, i32) {
    %c0_i32 = arith.constant 0 : i32
    %c0_i32_0 = arith.constant 0 : i32
    %c0_i32_1 = arith.constant 0 : i32
    return %c0_i32, %c0_i32_0 : i32, i32
  }
  func.func @transform_6(%arg0: i32) -> (i32, i32) {
    %c0_i32 = arith.constant 0 : i32
    %c0_i32_0 = arith.constant 0 : i32
    return %arg0, %c0_i32 : i32, i32
  }
  func.func @transform_7(%arg0: i32) -> (i32, i32) {
    %c0_i32 = arith.constant 0 : i32
    %c0_i32_0 = arith.constant 0 : i32
    return %arg0, %c0_i32 : i32, i32
  }
  func.func @transform_8(%arg0: i32) -> (i32, i32) {
    %c0_i32 = arith.constant 0 : i32
    %c0_i32_0 = arith.constant 0 : i32
    return %arg0, %c0_i32 : i32, i32
  }
  func.func @transform_9(%arg0: i32) -> (i32, i32, i32) {
    %c0_i32 = arith.constant 0 : i32
    %c0_i32_0 = arith.constant 0 : i32
    %c0_i32_1 = arith.constant 0 : i32
    return %arg0, %c0_i32, %c0_i32_0 : i32, i32, i32
  }
  func.func @transform_10(%arg0: i32) -> (i32, i32) {
    %c0_i32 = arith.constant 0 : i32
    %c0_i32_0 = arith.constant 0 : i32
    return %arg0, %c0_i32 : i32, i32
  }
}

</mosaic_0001>

<llo_original>
// kernel: tpu_custom_call.1
$region0: #{tpu_custom_call.1}
  #allocation0 [shape = 'u32[]', space=smem, size = 0x4, offset = 0x4, fixed_abs, tag = 'smem constant byte address 0x4 - core index']
  #allocation1 [shape = 'u32[144,128]{1,0:T(1,128)}', space=vmem, size = 0x12000, scoped, tag = 'internal scratch']
  %s0 = inlined_call_operand.hbm [shape: f32[16,8,128], index: 0, kind: input, shape index: {}]
  %s1 = inlined_call_operand.hbm [shape: f32[16,8,128], index: 1, kind: input, shape index: {}]
  %s2 = inlined_call_operand.vmem [shape: bf16[128,128], index: 2, kind: input, shape index: {}]
  %s3 = inlined_call_operand.hbm [shape: f32[1,128], index: 3, kind: input, shape index: {}]
  %s4 = inlined_call_operand.hbm [shape: f32[1,128], index: 4, kind: input, shape index: {}]
  %s5 = inlined_call_operand.vmem [shape: f32[1,8], index: 5, kind: input, shape index: {}]
  %s6 = inlined_call_operand.vmem [shape: f32[16,1], index: 6, kind: input, shape index: {}]
  %s7 = inlined_call_operand.vmem [shape: f32[16,8], index: 7, kind: input, shape index: {}]
  %s8 = inlined_call_operand.vmem [shape: f32[16,8], index: 8, kind: input, shape index: {}]
  %s9 = inlined_call_operand.hbm [shape: f32[2,1,128], index: 9, kind: output, shape index: {0}]
  %s10 = inlined_call_operand.vmem [shape: f32[16,1], index: 10, kind: output, shape index: {1}]
  %11 = xla_tuple %s9, %s10
  %s12 = sld [smem:[#allocation0]]
  $region93: #{tpu_custom_call.1} parent=0
    _
  %s14 = ssub.s32 1, %s12
  %s15 = scalar_select 0, %s14, %s12
  $region1: #{tpu_custom_call.1} parent=0
    #allocation2 [shape = 'u8[65536]{0}', space=vmem, size = 0x10000, scoped, tag = 'input window, operand 0']
    #allocation3 [shape = 's32[2]{0}', space=sflag, size = 0x8, scoped, tag = 'scoped memory for tpu_custom_call.1']
    #allocation4 [shape = 's32[2]{0}', space=sflag, size = 0x8, scoped, tag = 'scoped memory for tpu_custom_call.1']
    #allocation5 [shape = 'u8[65536]{0}', space=vmem, size = 0x10000, scoped, tag = 'input window, operand 1']
    #allocation6 [shape = 's32[2]{0}', space=sflag, size = 0x8, scoped, tag = 'scoped memory for tpu_custom_call.1']
    #allocation7 [shape = 'u8[512]{0}', space=vmem, size = 0x400, scoped, tag = 'input window, operand 3, single buffered']
    #allocation8 [shape = 'u8[512]{0}', space=vmem, size = 0x400, scoped, tag = 'input window, operand 4, single buffered']
    #allocation9 [shape = 's32[1]{0}', space=sflag, size = 0x4, scoped, tag = 'scoped memory for tpu_custom_call.1']
    #allocation10 [shape = 'u8[1024]{0}', space=vmem, size = 0x400, scoped, tag = 'output window, operand 0']
    %16 = vsyncpa [#allocation3], 0
    %s17 = scalar_lea.sflag [#allocation3], 1
    %18 = vsyncpa %s17, 0
    %19 = vsyncpa [#allocation6], 0
    %s20 = scalar_lea.sflag [#allocation6], 1
    %21 = vsyncpa %s20, 0
    %22 = vsyncpa [#allocation9], 0
    %23 = vsyncpa [#allocation4], 0
    %s24 = scalar_lea.sflag [#allocation4], 1
    %25 = vsyncpa %s24, 0
    loop: start=0, step=1, limit=4
    $region2: #{tpu_custom_call.1} parent=1 // loop_pre_header
      _
    $region3: #{tpu_custom_call.1} parent=1 // loop_header
      %s27 = sphi 0, %s31
      %p28 = scmp.ge.s32.totalorder %s27, 4
      %s37 = sphi 0, %s39
      %s40 = sphi 0, %s37
      %s41 = sphi 0, %s40
      %s57 = sphi 0, %s41
      %s63 = sphi 0, %s65
      %s66 = sphi 0, %s63
      %s67 = sphi 0, %s66
      %s83 = sphi 0, %s67
      %s87 = sphi 0, %s87
      %s89 = sphi 0, %s87
      %s90 = sphi 0, %s89
      %s104 = sphi 0, %s90
      %s108 = sphi 0, %s108
      %s110 = sphi 0, %s108
      %s111 = sphi 0, %s110
      %s125 = sphi 0, %s111
      %s129 = sphi 0, %s129
      %s131 = sphi 0, %s129
      %s132 = sphi 0, %s131
      %s146 = sphi 0, %s132
      %s150 = sphi 0, %s150
      %s152 = sphi 0, %s150
      %s153 = sphi 0, %s152
      %s167 = sphi 0, %s153
      %s173 = sphi 0, %s175
      %s176 = sphi 0, %s173
      %s177 = sphi 0, %s176
      %s193 = sphi 0, %s177
      %s199 = sphi 0, %s201
      %s202 = sphi 0, %s199
      %s203 = sphi 0, %s202
      %s219 = sphi 0, %s203
      %s225 = sphi 0, %s227
      %s228 = sphi 0, %s225
      %s229 = sphi 0, %s228
      %s245 = sphi 0, %s229
      %s251 = sphi 0, %s253
      %s254 = sphi 0, %s251
      %s255 = sphi 0, %s254
      %s271 = sphi 0, %s255
      %s277 = sphi 0, %s279
      %s280 = sphi 0, %s277
      %s281 = sphi 0, %s280
      %s297 = sphi 0, %s281
    $region4: #{tpu_custom_call.1} parent=1 // loop_header_branch
      %30 = sbr.rel (%p28) target = $region8
    $region5: #{tpu_custom_call.1} parent=1 // loop_body
      %s32 = ssub.s32 %s27, 1
      %s33 = ssub.s32 %s27, 2
      %s34 = sadd.s32 %s27, 1
      %s35 = ssub.s32 %s27, %s34
      %p36 = scmp.eq.s32.totalorder %s35, 0
      %s38 = sadd.s32 %s37, 1
      %s39 = scalar_select %p36, %s37, %s38
      %p42 = pneg %p36
      %p43 = scmp.eq.s32.totalorder %s27, 1
      %p44 = por %p42, %p43
      %p45 = scmp.ne.s32.totalorder %s37, %s40
      %p46 = scmp.eq.s32.totalorder %s27, 0
      %p47 = por %p45, %p46
      %p48 = scmp.ne.s32.totalorder %s37, %s40
      %p49 = scmp.eq.s32.totalorder %s32, 1
      %p50 = por %p48, %p49
      %p51 = scmp.ne.s32.totalorder %s40, %s41
      %p52 = scmp.eq.s32.totalorder %s32, 0
      %p53 = por %p51, %p52
      %p54 = scmp.ne.s32.totalorder %s40, %s41
      %p55 = scmp.eq.s32.totalorder %s33, 1
      %p56 = por %p54, %p55
      %p58 = scmp.ne.s32.totalorder %s41, %s57
      %p59 = scmp.eq.s32.totalorder %s33, 0
      %p60 = por %p58, %p59
      %s61 = ssub.s32 %s27, %s34
      %p62 = scmp.eq.s32.totalorder %s61, 0
      %s64 = sadd.s32 %s63, 1
      %s65 = scalar_select %p62, %s63, %s64
      %p68 = pneg %p62
      %p69 = scmp.eq.s32.totalorder %s27, 1
      %p70 = por %p68, %p69
      %p71 = scmp.ne.s32.totalorder %s63, %s66
      %p72 = scmp.eq.s32.totalorder %s27, 0
      %p73 = por %p71, %p72
      %p74 = scmp.ne.s32.totalorder %s63, %s66
      %p75 = scmp.eq.s32.totalorder %s32, 1
      %p76 = por %p74, %p75
      %p77 = scmp.ne.s32.totalorder %s66, %s67
      %p78 = scmp.eq.s32.totalorder %s32, 0
      %p79 = por %p77, %p78
      %p80 = scmp.ne.s32.totalorder %s66, %s67
      %p81 = scmp.eq.s32.totalorder %s33, 1
      %p82 = por %p80, %p81
      %p84 = scmp.ne.s32.totalorder %s67, %s83
      %p85 = scmp.eq.s32.totalorder %s33, 0
      %p86 = por %p84, %p85
      %s88 = sadd.s32 %s87, 1
      %p91 = scmp.eq.s32.totalorder %s27, 1
      %p92 = scmp.ne.s32.totalorder %s87, %s89
      %p93 = scmp.eq.s32.totalorder %s27, 0
      %p94 = por %p92, %p93
      %p95 = scmp.ne.s32.totalorder %s87, %s89
      %p96 = scmp.eq.s32.totalorder %s32, 1
      %p97 = por %p95, %p96
      %p98 = scmp.ne.s32.totalorder %s89, %s90
      %p99 = scmp.eq.s32.totalorder %s32, 0
      %p100 = por %p98, %p99
      %p101 = scmp.ne.s32.totalorder %s89, %s90
      %p102 = scmp.eq.s32.totalorder %s33, 1
      %p103 = por %p101, %p102
      %p105 = scmp.ne.s32.totalorder %s90, %s104
      %p106 = scmp.eq.s32.totalorder %s33, 0
      %p107 = por %p105, %p106
      %s109 = sadd.s32 %s108, 1
      %p112 = scmp.eq.s32.totalorder %s27, 1
      %p113 = scmp.ne.s32.totalorder %s108, %s110
      %p114 = scmp.eq.s32.totalorder %s27, 0
      %p115 = por %p113, %p114
      %p116 = scmp.ne.s32.totalorder %s108, %s110
      %p117 = scmp.eq.s32.totalorder %s32, 1
      %p118 = por %p116, %p117
      %p119 = scmp.ne.s32.totalorder %s110, %s111
      %p120 = scmp.eq.s32.totalorder %s32, 0
      %p121 = por %p119, %p120
      %p122 = scmp.ne.s32.totalorder %s110, %s111
      %p123 = scmp.eq.s32.totalorder %s33, 1
      %p124 = por %p122, %p123
      %p126 = scmp.ne.s32.totalorder %s111, %s125
      %p127 = scmp.eq.s32.totalorder %s33, 0
      %p128 = por %p126, %p127
      %s130 = sadd.s32 %s129, 1
      %p133 = scmp.eq.s32.totalorder %s27, 1
      %p134 = scmp.ne.s32.totalorder %s129, %s131
      %p135 = scmp.eq.s32.totalorder %s27, 0
      %p136 = por %p134, %p135
      %p137 = scmp.ne.s32.totalorder %s129, %s131
      %p138 = scmp.eq.s32.totalorder %s32, 1
      %p139 = por %p137, %p138
      %p140 = scmp.ne.s32.totalorder %s131, %s132
      %p141 = scmp.eq.s32.totalorder %s32, 0
      %p142 = por %p140, %p141
      %p143 = scmp.ne.s32.totalorder %s131, %s132
      %p144 = scmp.eq.s32.totalorder %s33, 1
      %p145 = por %p143, %p144
      %p147 = scmp.ne.s32.totalorder %s132, %s146
      %p148 = scmp.eq.s32.totalorder %s33, 0
      %p149 = por %p147, %p148
      %s151 = sadd.s32 %s150, 1
      %p154 = scmp.eq.s32.totalorder %s27, 1
      %p155 = scmp.ne.s32.totalorder %s150, %s152
      %p156 = scmp.eq.s32.totalorder %s27, 0
      %p157 = por %p155, %p156
      %p158 = scmp.ne.s32.totalorder %s150, %s152
      %p159 = scmp.eq.s32.totalorder %s32, 1
      %p160 = por %p158, %p159
      %p161 = scmp.ne.s32.totalorder %s152, %s153
      %p162 = scmp.eq.s32.totalorder %s32, 0
      %p163 = por %p161, %p162
      %p164 = scmp.ne.s32.totalorder %s152, %s153
      %p165 = scmp.eq.s32.totalorder %s33, 1
      %p166 = por %p164, %p165
      %p168 = scmp.ne.s32.totalorder %s153, %s167
      %p169 = scmp.eq.s32.totalorder %s33, 0
      %p170 = por %p168, %p169
      %s171 = ssub.s32 %s27, %s34
      %p172 = scmp.eq.s32.totalorder %s171, 0
      %s174 = sadd.s32 %s173, 1
      %s175 = scalar_select %p172, %s173, %s174
      %p178 = pneg %p172
      %p179 = scmp.eq.s32.totalorder %s27, 1
      %p180 = por %p178, %p179
      %p181 = scmp.ne.s32.totalorder %s173, %s176
      %p182 = scmp.eq.s32.totalorder %s27, 0
      %p183 = por %p181, %p182
      %p184 = scmp.ne.s32.totalorder %s173, %s176
      %p185 = scmp.eq.s32.totalorder %s32, 1
      %p186 = por %p184, %p185
      %p187 = scmp.ne.s32.totalorder %s176, %s177
      %p188 = scmp.eq.s32.totalorder %s32, 0
      %p189 = por %p187, %p188
      %p190 = scmp.ne.s32.totalorder %s176, %s177
      %p191 = scmp.eq.s32.totalorder %s33, 1
      %p192 = por %p190, %p191
      %p194 = scmp.ne.s32.totalorder %s177, %s193
      %p195 = scmp.eq.s32.totalorder %s33, 0
      %p196 = por %p194, %p195
      %s197 = ssub.s32 %s27, %s34
      %p198 = scmp.eq.s32.totalorder %s197, 0
      %s200 = sadd.s32 %s199, 1
      %s201 = scalar_select %p198, %s199, %s200
      %p204 = pneg %p198
      %p205 = scmp.eq.s32.totalorder %s27, 1
      %p206 = por %p204, %p205
      %p207 = scmp.ne.s32.totalorder %s199, %s202
      %p208 = scmp.eq.s32.totalorder %s27, 0
      %p209 = por %p207, %p208
      %p210 = scmp.ne.s32.totalorder %s199, %s202
      %p211 = scmp.eq.s32.totalorder %s32, 1
      %p212 = por %p210, %p211
      %p213 = scmp.ne.s32.totalorder %s202, %s203
      %p214 = scmp.eq.s32.totalorder %s32, 0
      %p215 = por %p213, %p214
      %p216 = scmp.ne.s32.totalorder %s202, %s203
      %p217 = scmp.eq.s32.totalorder %s33, 1
      %p218 = por %p216, %p217
      %p220 = scmp.ne.s32.totalorder %s203, %s219
      %p221 = scmp.eq.s32.totalorder %s33, 0
      %p222 = por %p220, %p221
      %s223 = ssub.s32 %s27, %s34
      %p224 = scmp.eq.s32.totalorder %s223, 0
      %s226 = sadd.s32 %s225, 1
      %s227 = scalar_select %p224, %s225, %s226
      %p230 = pneg %p224
      %p231 = scmp.eq.s32.totalorder %s27, 1
      %p232 = por %p230, %p231
      %p233 = scmp.ne.s32.totalorder %s225, %s228
      %p234 = scmp.eq.s32.totalorder %s27, 0
      %p235 = por %p233, %p234
      %p236 = scmp.ne.s32.totalorder %s225, %s228
      %p237 = scmp.eq.s32.totalorder %s32, 1
      %p238 = por %p236, %p237
      %p239 = scmp.ne.s32.totalorder %s228, %s229
      %p240 = scmp.eq.s32.totalorder %s32, 0
      %p241 = por %p239, %p240
      %p242 = scmp.ne.s32.totalorder %s228, %s229
      %p243 = scmp.eq.s32.totalorder %s33, 1
      %p244 = por %p242, %p243
      %p246 = scmp.ne.s32.totalorder %s229, %s245
      %p247 = scmp.eq.s32.totalorder %s33, 0
      %p248 = por %p246, %p247
      %s249 = ssub.s32 %s27, %s34
      %p250 = scmp.eq.s32.totalorder %s249, 0
      %s252 = sadd.s32 %s251, 1
      %s253 = scalar_select %p250, %s251, %s252
      %p256 = pneg %p250
      %p257 = scmp.eq.s32.totalorder %s27, 1
      %p258 = por %p256, %p257
      %p259 = scmp.ne.s32.totalorder %s251, %s254
      %p260 = scmp.eq.s32.totalorder %s27, 0
      %p261 = por %p259, %p260
      %p262 = scmp.ne.s32.totalorder %s251, %s254
      %p263 = scmp.eq.s32.totalorder %s32, 1
      %p264 = por %p262, %p263
      %p265 = scmp.ne.s32.totalorder %s254, %s255
      %p266 = scmp.eq.s32.totalorder %s32, 0
      %p267 = por %p265, %p266
      %p268 = scmp.ne.s32.totalorder %s254, %s255
      %p269 = scmp.eq.s32.totalorder %s33, 1
      %p270 = por %p268, %p269
      %p272 = scmp.ne.s32.totalorder %s255, %s271
      %p273 = scmp.eq.s32.totalorder %s33, 0
      %p274 = por %p272, %p273
      %s275 = ssub.s32 %s27, %s34
      %p276 = scmp.eq.s32.totalorder %s275, 0
      %s278 = sadd.s32 %s277, 1
      %s279 = scalar_select %p276, %s277, %s278
      %p282 = pneg %p276
      %p283 = scmp.eq.s32.totalorder %s27, 1
      %p284 = por %p282, %p283
      %p285 = scmp.ne.s32.totalorder %s277, %s280
      %p286 = scmp.eq.s32.totalorder %s27, 0
      %p287 = por %p285, %p286
      %p288 = scmp.ne.s32.totalorder %s277, %s280
      %p289 = scmp.eq.s32.totalorder %s32, 1
      %p290 = por %p288, %p289
      %p291 = scmp.ne.s32.totalorder %s280, %s281
      %p292 = scmp.eq.s32.totalorder %s32, 0
      %p293 = por %p291, %p292
      %p294 = scmp.ne.s32.totalorder %s280, %s281
      %p295 = scmp.eq.s32.totalorder %s33, 1
      %p296 = por %p294, %p295
      %p298 = scmp.ne.s32.totalorder %s281, %s297
      %p299 = scmp.eq.s32.totalorder %s33, 0
      %p300 = por %p298, %p299
      %p301 = scmp.le.s32.totalorder 1, %s27
      %p302 = scmp.lt.s32.totalorder %s27, 3
      %p303 = pnand %p301, %p302
      %p304 = pneg %p303
      // Predicated region
      $region9: #{tpu_custom_call.1} parent=5 // pred_check
        _
      $region10: #{tpu_custom_call.1} parent=5 // pred_check_branch
        %306 = sbr.rel (%p303) target = $region12
      $region11: #{tpu_custom_call.1} parent=5 // pred_region
        %s307 = ssub.s32 %s27, 1
        // Predicated region
        $region13: #{tpu_custom_call.1} parent=11 // pred_check
          %p308 = pneg %p100
        $region14: #{tpu_custom_call.1} parent=11 // pred_check_branch
          %310 = sbr.rel (%p308) target = $region16
        $region15: #{tpu_custom_call.1} parent=11 // pred_region
          _
        $region16: #{tpu_custom_call.1} parent=11 // pred_fallthru
          _
        // Predicated region
        $region17: #{tpu_custom_call.1} parent=11 // pred_check
          %p311 = pneg %p121
        $region18: #{tpu_custom_call.1} parent=11 // pred_check_branch
          %313 = sbr.rel (%p311) target = $region20
        $region19: #{tpu_custom_call.1} parent=11 // pred_region
          %s315 = ssub.s32 16, 16
          %316 = vsyncadd [#allocation6], %s315
          %s318 = sshll.u32 [#allocation7], 4
          %s319 = int_to_ptr.vmem [resolvable:$true] %s318
          %321 = dma.hbm_to_vmem [thread:$0]  %s3, 16, %s319, [#allocation6]
        $region20: #{tpu_custom_call.1} parent=11 // pred_fallthru
          _
        // Predicated region
        $region21: #{tpu_custom_call.1} parent=11 // pred_check
          %p322 = pneg %p142
        $region22: #{tpu_custom_call.1} parent=11 // pred_check_branch
          %324 = sbr.rel (%p322) target = $region24
        $region23: #{tpu_custom_call.1} parent=11 // pred_region
          %s326 = ssub.s32 16, 16
          %327 = vsyncadd [#allocation9], %s326
          %s329 = sshll.u32 [#allocation8], 4
          %s330 = int_to_ptr.vmem [resolvable:$true] %s329
          %332 = dma.hbm_to_vmem [thread:$0]  %s4, 16, %s330, [#allocation9]
        $region24: #{tpu_custom_call.1} parent=11 // pred_fallthru
          _
        // Predicated region
        $region25: #{tpu_custom_call.1} parent=11 // pred_check
          %p333 = pneg %p163
        $region26: #{tpu_custom_call.1} parent=11 // pred_check_branch
          %335 = sbr.rel (%p333) target = $region28
        $region27: #{tpu_custom_call.1} parent=11 // pred_region
          _
        $region28: #{tpu_custom_call.1} parent=11 // pred_fallthru
          _
      $region12: #{tpu_custom_call.1} parent=5 // pred_fallthru
        _
      %p336 = scmp.lt.s32.totalorder %s27, 2
      // Predicated region
      $region29: #{tpu_custom_call.1} parent=5 // pred_check
        %p337 = pneg %p336
      $region30: #{tpu_custom_call.1} parent=5 // pred_check_branch
        %339 = sbr.rel (%p337) target = $region32
      $region31: #{tpu_custom_call.1} parent=5 // pred_region
        // Predicated region
        $region33: #{tpu_custom_call.1} parent=31 // pred_check
          %p340 = pneg %p47
        $region34: #{tpu_custom_call.1} parent=31 // pred_check_branch
          %342 = sbr.rel (%p340) target = $region36
        $region35: #{tpu_custom_call.1} parent=31 // pred_region
          %s343 = sand.u32 %s37, 1
          %s344 = scalar_lea.sflag [#allocation3], %s343
          %s345 = sand.u32 %s37, 1
          %s346 = smul.addr %s345, 64
          %s347 = scalar_lea.vmem [#allocation2], %s346
          %s348 = smul.u32 8, %s27
          %s350 = ssub.s32 1024, 1024
          %351 = vsyncadd %s344, %s350
          %s352 = smul.addr %s348, 128
          %s353 = scalar_lea.hbm %s0, %s352
          %s354 = sshll.u32 %s347, 4
          %s355 = int_to_ptr.vmem [resolvable:$true] %s354
          %360 = dma.hbm_to_vmem [thread:$0]  %s353, 1024, %s355, %s344, 128, 128, 8
        $region36: #{tpu_custom_call.1} parent=31 // pred_fallthru
          _
        // Predicated region
        $region37: #{tpu_custom_call.1} parent=31 // pred_check
          %p361 = pneg %p73
        $region38: #{tpu_custom_call.1} parent=31 // pred_check_branch
          %363 = sbr.rel (%p361) target = $region40
        $region39: #{tpu_custom_call.1} parent=31 // pred_region
          %s364 = sand.u32 %s27, 1
          %s365 = scalar_lea.sflag [#allocation6], %s364
          %s366 = sand.u32 %s63, 1
          %s367 = smul.addr %s366, 64
          %s368 = scalar_lea.vmem [#allocation5], %s367
          %s369 = smul.u32 8, %s27
          %s371 = ssub.s32 1024, 1024
          %372 = vsyncadd %s365, %s371
          %s373 = smul.addr %s369, 128
          %s374 = scalar_lea.hbm %s1, %s373
          %s375 = sshll.u32 %s368, 4
          %s376 = int_to_ptr.vmem [resolvable:$true] %s375
          %381 = dma.hbm_to_vmem [thread:$0]  %s374, 1024, %s376, %s365, 128, 128, 8
        $region40: #{tpu_custom_call.1} parent=31 // pred_fallthru
          _
        // Predicated region
        $region41: #{tpu_custom_call.1} parent=31 // pred_check
          %p382 = pneg %p183
        $region42: #{tpu_custom_call.1} parent=31 // pred_check_branch
          %384 = sbr.rel (%p382) target = $region44
        $region43: #{tpu_custom_call.1} parent=31 // pred_region
          %p385 = scmp.lt.s32.totalorder %s27, 1
          %s386 = scalar_select %p385, %s27, 1
          %s387 = smul.addr %s386, 8
          %s388 = scalar_lea.vmem %s6, %s387
        $region44: #{tpu_custom_call.1} parent=31 // pred_fallthru
          _
        // Predicated region
        $region45: #{tpu_custom_call.1} parent=31 // pred_check
          %p389 = pneg %p209
        $region46: #{tpu_custom_call.1} parent=31 // pred_check_branch
          %391 = sbr.rel (%p389) target = $region48
        $region47: #{tpu_custom_call.1} parent=31 // pred_region
          %p392 = scmp.lt.s32.totalorder %s27, 1
          %s393 = scalar_select %p392, %s27, 1
          %s394 = smul.addr %s393, 8
          %s395 = scalar_lea.vmem %s7, %s394
        $region48: #{tpu_custom_call.1} parent=31 // pred_fallthru
          _
        // Predicated region
        $region49: #{tpu_custom_call.1} parent=31 // pred_check
          %p396 = pneg %p235
        $region50: #{tpu_custom_call.1} parent=31 // pred_check_branch
          %398 = sbr.rel (%p396) target = $region52
        $region51: #{tpu_custom_call.1} parent=31 // pred_region
          %p399 = scmp.lt.s32.totalorder %s27, 1
          %s400 = scalar_select %p399, %s27, 1
          %s401 = smul.addr %s400, 8
          %s402 = scalar_lea.vmem %s8, %s401
        $region52: #{tpu_custom_call.1} parent=31 // pred_fallthru
          _
      $region32: #{tpu_custom_call.1} parent=5 // pred_fallthru
        _
      %p403 = scmp.le.s32.totalorder 1, %s27
      %p404 = scmp.lt.s32.totalorder %s27, 3
      %p405 = pnand %p403, %p404
      %p406 = pneg %p405
      // Predicated region
      $region53: #{tpu_custom_call.1} parent=5 // pred_check
        _
      $region54: #{tpu_custom_call.1} parent=5 // pred_check_branch
        %408 = sbr.rel (%p405) target = $region56
      $region55: #{tpu_custom_call.1} parent=5 // pred_region
        %s409 = ssub.s32 %s27, 1
        %s410 = sand.u32 %s40, 1
        %s411 = scalar_lea.sflag [#allocation3], %s410
        %s412 = sand.u32 %s40, 1
        %s413 = smul.addr %s412, 64
        %s414 = scalar_lea.vmem [#allocation2], %s413
        // Predicated region
        $region57: #{tpu_custom_call.1} parent=55 // pred_check
          %p415 = pneg %p53
        $region58: #{tpu_custom_call.1} parent=55 // pred_check_branch
          %417 = sbr.rel (%p415) target = $region60
        $region59: #{tpu_custom_call.1} parent=55 // pred_region
          %418 = dma.done %s411, 1024
        $region60: #{tpu_custom_call.1} parent=55 // pred_fallthru
          _
        %s419 = sand.u32 %s32, 1
        %s420 = scalar_lea.sflag [#allocation6], %s419
        %s421 = sand.u32 %s66, 1
        %s422 = smul.addr %s421, 64
        %s423 = scalar_lea.vmem [#allocation5], %s422
        // Predicated region
        $region61: #{tpu_custom_call.1} parent=55 // pred_check
          %p424 = pneg %p79
        $region62: #{tpu_custom_call.1} parent=55 // pred_check_branch
          %426 = sbr.rel (%p424) target = $region64
        $region63: #{tpu_custom_call.1} parent=55 // pred_region
          %427 = dma.done %s420, 1024
        $region64: #{tpu_custom_call.1} parent=55 // pred_fallthru
          _
        // Predicated region
        $region65: #{tpu_custom_call.1} parent=55 // pred_check
          %p428 = pneg %p121
        $region66: #{tpu_custom_call.1} parent=55 // pred_check_branch
          %430 = sbr.rel (%p428) target = $region68
        $region67: #{tpu_custom_call.1} parent=55 // pred_region
          %431 = dma.done [#allocation6], 16
        $region68: #{tpu_custom_call.1} parent=55 // pred_fallthru
          _
        // Predicated region
        $region69: #{tpu_custom_call.1} parent=55 // pred_check
          %p432 = pneg %p142
        $region70: #{tpu_custom_call.1} parent=55 // pred_check_branch
          %434 = sbr.rel (%p432) target = $region72
        $region71: #{tpu_custom_call.1} parent=55 // pred_region
          %435 = dma.done [#allocation9], 16
        $region72: #{tpu_custom_call.1} parent=55 // pred_fallthru
          _
        %s436 = sand.u32 %s40, 1
        %s437 = scalar_lea.sflag [#allocation3], %s436
        %s438 = sand.u32 %s40, 1
        %s439 = smul.addr %s438, 64
        %s440 = scalar_lea.vmem [#allocation2], %s439
        %p441 = pneg %p53
        %p442 = pneg %p50
        %s443 = sand.u32 %s32, 1
        %s444 = scalar_lea.sflag [#allocation6], %s443
        %s445 = sand.u32 %s66, 1
        %s446 = smul.addr %s445, 64
        %s447 = scalar_lea.vmem [#allocation5], %s446
        %p448 = pneg %p79
        %p449 = pneg %p76
        %p450 = pneg %p100
        %p451 = pneg %p97
        %p452 = pneg %p121
        %p453 = pneg %p118
        %p454 = pneg %p142
        %p455 = pneg %p139
        %p456 = pneg %p163
        %p457 = pneg %p160
        %p458 = scmp.lt.s32.totalorder %s32, 1
        %s459 = scalar_select %p458, %s32, 1
        %s460 = smul.addr %s459, 8
        %s461 = scalar_lea.vmem %s6, %s460
        %p462 = pneg %p189
        %p463 = pneg %p186
        %p464 = scmp.lt.s32.totalorder %s32, 1
        %s465 = scalar_select %p464, %s32, 1
        %s466 = smul.addr %s465, 8
        %s467 = scalar_lea.vmem %s7, %s466
        %p468 = pneg %p215
        %p469 = pneg %p212
        %p470 = scmp.lt.s32.totalorder %s32, 1
        %s471 = scalar_select %p470, %s32, 1
        %s472 = smul.addr %s471, 8
        %s473 = scalar_lea.vmem %s8, %s472
        %p474 = pneg %p241
        %p475 = pneg %p238
        %p476 = pneg %p267
        %p477 = pneg %p264
        %s478 = sand.u32 %s254, 1
        %s479 = scalar_lea.sflag [#allocation4], %s478
        %s480 = sand.u32 %s254, 1
        %s481 = scalar_lea.vmem [#allocation10], %s480
        %p482 = pneg %p293
        %p483 = pneg %p290
        %p484 = scmp.lt.s32.totalorder %s32, 1
        %s485 = scalar_select %p484, %s32, 1
        %s486 = smul.addr %s485, 8
        %s487 = scalar_lea.vmem %s10, %s486
        %s488 = smul.u32 8, %s32
        %s489 = smul.u32 8, %s32
        %p490 = scmp.lt.s32.totalorder %s32, 1
        %s491 = scalar_select %p490, %s32, 1
        %s492 = smul.addr %s491, 8
        %s493 = scalar_lea.vmem %s6, %s492
        %p494 = scmp.lt.s32.totalorder %s32, 1
        %s495 = scalar_select %p494, %s32, 1
        %s496 = smul.addr %s495, 8
        %s497 = scalar_lea.vmem %s7, %s496
        %p498 = scmp.lt.s32.totalorder %s32, 1
        %s499 = scalar_select %p498, %s32, 1
        %s500 = smul.addr %s499, 8
        %s501 = scalar_lea.vmem %s8, %s500
        %p502 = scmp.lt.s32.totalorder %s32, 1
        %s503 = scalar_select %p502, %s32, 1
        %s504 = smul.addr %s503, 8
        %s505 = scalar_lea.vmem %s10, %s504
        %v507 = vld [vmem:[%s2] sm:$0xf]
        %v508 = vld [vmem:[%s2 + $0x4] sm:$0xf]
        %v509 = vld [vmem:[%s2 + $0x8] sm:$0xf]
        %v510 = vld [vmem:[%s2 + $0xc] sm:$0xf]
        %v511 = vld [vmem:[%s2 + $0x10] sm:$0xf]
        %v512 = vld [vmem:[%s2 + $0x14] sm:$0xf]
        %v513 = vld [vmem:[%s2 + $0x18] sm:$0xf]
        %v514 = vld [vmem:[%s2 + $0x1c] sm:$0xf]
        %v515 = vld [vmem:[%s2 + $0x20] sm:$0xf]
        %v516 = vld [vmem:[%s2 + $0x24] sm:$0xf]
        %v517 = vld [vmem:[%s2 + $0x28] sm:$0xf]
        %v518 = vld [vmem:[%s2 + $0x2c] sm:$0xf]
        %v519 = vld [vmem:[%s2 + $0x30] sm:$0xf]
        %v520 = vld [vmem:[%s2 + $0x34] sm:$0xf]
        %v521 = vld [vmem:[%s2 + $0x38] sm:$0xf]
        %v522 = vld [vmem:[%s2 + $0x3c] sm:$0xf]
        %v523 = vld [vmem:[#allocation7] sm:$0x1]
        %v524 = vld [vmem:[%s423] sm:$0xff]
        %v525 = vld [vmem:[%s423 + $0x8] sm:$0xff]
        %v526 = vld [vmem:[%s423 + $0x10] sm:$0xff]
        %v527 = vld [vmem:[%s423 + $0x18] sm:$0xff]
        %v528 = vld [vmem:[%s423 + $0x20] sm:$0xff]
        %v529 = vld [vmem:[%s423 + $0x28] sm:$0xff]
        %v530 = vld [vmem:[%s423 + $0x30] sm:$0xff]
        %v531 = vld [vmem:[%s423 + $0x38] sm:$0xff]
        %v532 = vpack.c.bf16 %v525, %v524
        %v533 = vpack.c.bf16 %v527, %v526
        %v534 = vpack.c.bf16 %v529, %v528
        %v535 = vpack.c.bf16 %v531, %v530
        %v537 = vlaneseq
        %v538 = vshrl.u32 %v537, 7
        %v539 = vsub.s32 0, %v538
        %v540 = vrot.slane %v523, %v539
        %v558 = vunpack.c.l.b16 %v507
        %v559 = vunpack.c.l.b16 %v508
        %v560 = vunpack.c.l.b16 %v509
        %v561 = vunpack.c.l.b16 %v510
        %v562 = vunpack.c.l.b16 %v511
        %v563 = vunpack.c.l.b16 %v512
        %v564 = vunpack.c.l.b16 %v513
        %v565 = vunpack.c.l.b16 %v514
        %v566 = vunpack.c.l.b16 %v515
        %v567 = vunpack.c.l.b16 %v516
        %v568 = vunpack.c.l.b16 %v517
        %v569 = vunpack.c.l.b16 %v518
        %v570 = vunpack.c.l.b16 %v519
        %v571 = vunpack.c.l.b16 %v520
        %v572 = vunpack.c.l.b16 %v521
        %v573 = vunpack.c.l.b16 %v522
        %v574 = vpack.c.b16 %v559, %v558
        %v575 = vpack.c.b16 %v561, %v560
        %v576 = vpack.c.b16 %v563, %v562
        %v577 = vpack.c.b16 %v565, %v564
        %v578 = vpack.c.b16 %v567, %v566
        %v579 = vpack.c.b16 %v569, %v568
        %v580 = vpack.c.b16 %v571, %v570
        %v581 = vpack.c.b16 %v573, %v572
        %590 = vmatprep.subr.bf16.mxu0 0
        %591 = vmatpush1.bf16.msra.mxu0 %v574
        %592 = vmatprep.subr.bf16.mxu0 0
        %593 = vmatpush1.bf16.msra.mxu0 %v575
        %594 = vmatprep.subr.bf16.mxu0 0
        %595 = vmatpush1.bf16.msra.mxu0 %v576
        %596 = vmatprep.subr.bf16.mxu0 0
        %597 = vmatpush1.bf16.msra.mxu0 %v577
        %598 = vmatprep.subr.bf16.mxu0 0
        %599 = vmatpush1.bf16.msra.mxu0 %v578
        %600 = vmatprep.subr.bf16.mxu0 0
        %601 = vmatpush1.bf16.msra.mxu0 %v579
        %602 = vmatprep.subr.bf16.mxu0 0
        %603 = vmatpush1.bf16.msra.mxu0 %v580
        %604 = vmatprep.subr.bf16.mxu0 0
        %605 = vmatpush1.bf16.msra.mxu0 %v581
        %606 = vmatprep.subr.bf16.mxu0 0
        %607 = vmatpush1.bf16.msra.mxu0 0
        %608 = vmatprep.subr.bf16.mxu0 0
        %609 = vmatpush1.bf16.msra.mxu0 0
        %610 = vmatprep.subr.bf16.mxu0 0
        %611 = vmatpush1.bf16.msra.mxu0 0
        %612 = vmatprep.subr.bf16.mxu0 0
        %613 = vmatpush1.bf16.msra.mxu0 0
        %614 = vmatprep.subr.bf16.mxu0 0
        %615 = vmatpush1.bf16.msra.mxu0 0
        %616 = vmatprep.subr.bf16.mxu0 0
        %617 = vmatpush1.bf16.msra.mxu0 0
        %618 = vmatprep.subr.bf16.mxu0 0
        %619 = vmatpush1.bf16.msra.mxu0 0
        %620 = vmatprep.subr.bf16.mxu0 0
        %621 = vmatpush1.bf16.msra.mxu0 0
        %622 = vmatprep.mubr.bf16.mxu0 0
        %623 = vmatmul.mubr.bf16.gmra.mrb[0].mxu0 %v532
        %v624 = vpop.f32.mrb[0].mxu0
        %v625 = vadd.f32 %v540, %v624
        %v626 = vpop.f32.mrb[0].mxu0
        %v627 = vpop.f32.mrb[0].mxu0
        %v628 = vadd.f32 %v540, %v627
        %v629 = vpop.f32.mrb[0].mxu0
        %630 = vmatprep.mubr.bf16.mxu0 0
        %631 = vmatmul.mubr.bf16.gmra.mrb[0].mxu0 %v533
        %v632 = vpop.f32.mrb[0].mxu0
        %v633 = vadd.f32 %v540, %v632
        %v634 = vpop.f32.mrb[0].mxu0
        %v635 = vpop.f32.mrb[0].mxu0
        %v636 = vadd.f32 %v540, %v635
        %v637 = vpop.f32.mrb[0].mxu0
        %638 = vmatprep.mubr.bf16.mxu0 0
        %639 = vmatmul.mubr.bf16.gmra.mrb[0].mxu0 %v534
        %v640 = vpop.f32.mrb[0].mxu0
        %v641 = vadd.f32 %v540, %v640
        %v642 = vpop.f32.mrb[0].mxu0
        %v643 = vpop.f32.mrb[0].mxu0
        %v644 = vadd.f32 %v540, %v643
        %v645 = vpop.f32.mrb[0].mxu0
        %646 = vmatprep.mubr.bf16.mxu0 0
        %647 = vmatmul.mubr.bf16.gmra.mrb[0].mxu0 %v535
        %v648 = vpop.f32.mrb[0].mxu0
        %v649 = vadd.f32 %v540, %v648
        %v650 = vpop.f32.mrb[0].mxu0
        %v651 = vpop.f32.mrb[0].mxu0
        %v652 = vadd.f32 %v540, %v651
        %v653 = vpop.f32.mrb[0].mxu0
        %654 = vdwg.mxu0
        %v655 = vtanh.pop %v625
        %v656 = vtanh.pop %v628
        %v657 = vtanh.pop %v633
        %v658 = vtanh.pop %v636
        %v659 = vtanh.pop %v641
        %v660 = vtanh.pop %v644
        %v661 = vtanh.pop %v649
        %v662 = vtanh.pop %v652
        %v663 = vld [vmem:[%s414] sm:$0xff]
        %v664 = vld [vmem:[%s414 + $0x8] sm:$0xff]
        %v665 = vld [vmem:[%s414 + $0x10] sm:$0xff]
        %v666 = vld [vmem:[%s414 + $0x18] sm:$0xff]
        %v667 = vld [vmem:[%s414 + $0x20] sm:$0xff]
        %v668 = vld [vmem:[%s414 + $0x28] sm:$0xff]
        %v669 = vld [vmem:[%s414 + $0x30] sm:$0xff]
        %v670 = vld [vmem:[%s414 + $0x38] sm:$0xff]
        %v671 = vpack.c.bf16 %v664, %v663
        %v672 = vpack.c.bf16 %v666, %v665
        %v673 = vpack.c.bf16 %v668, %v667
        %v674 = vpack.c.bf16 %v670, %v669
        %675 = vmatprep.subr.bf16.mxu0 0
        %676 = vmatpush1.bf16.msra.mxu0 %v574
        %677 = vmatprep.subr.bf16.mxu0 0
        %678 = vmatpush1.bf16.msra.mxu0 %v575
        %679 = vmatprep.subr.bf16.mxu0 0
        %680 = vmatpush1.bf16.msra.mxu0 %v576
        %681 = vmatprep.subr.bf16.mxu0 0
        %682 = vmatpush1.bf16.msra.mxu0 %v577
        %683 = vmatprep.subr.bf16.mxu0 0
        %684 = vmatpush1.bf16.msra.mxu0 %v578
        %685 = vmatprep.subr.bf16.mxu0 0
        %686 = vmatpush1.bf16.msra.mxu0 %v579
        %687 = vmatprep.subr.bf16.mxu0 0
        %688 = vmatpush1.bf16.msra.mxu0 %v580
        %689 = vmatprep.subr.bf16.mxu0 0
        %690 = vmatpush1.bf16.msra.mxu0 %v581
        %691 = vmatprep.subr.bf16.mxu0 0
        %692 = vmatpush1.bf16.msra.mxu0 0
        %693 = vmatprep.subr.bf16.mxu0 0
        %694 = vmatpush1.bf16.msra.mxu0 0
        %695 = vmatprep.subr.bf16.mxu0 0
        %696 = vmatpush1.bf16.msra.mxu0 0
        %697 = vmatprep.subr.bf16.mxu0 0
        %698 = vmatpush1.bf16.msra.mxu0 0
        %699 = vmatprep.subr.bf16.mxu0 0
        %700 = vmatpush1.bf16.msra.mxu0 0
        %701 = vmatprep.subr.bf16.mxu0 0
        %702 = vmatpush1.bf16.msra.mxu0 0
        %703 = vmatprep.subr.bf16.mxu0 0
        %704 = vmatpush1.bf16.msra.mxu0 0
        %705 = vmatprep.subr.bf16.mxu0 0
        %706 = vmatpush1.bf16.msra.mxu0 0
        %707 = vmatprep.mubr.bf16.mxu0 0
        %708 = vmatmul.mubr.bf16.gmra.mrb[0].mxu0 %v671
        %v709 = vpop.f32.mrb[0].mxu0
        %v710 = vadd.f32 %v540, %v709
        %v711 = vpop.f32.mrb[0].mxu0
        %v712 = vpop.f32.mrb[0].mxu0
        %v713 = vadd.f32 %v540, %v712
        %v714 = vpop.f32.mrb[0].mxu0
        %715 = vmatprep.mubr.bf16.mxu0 0
        %716 = vmatmul.mubr.bf16.gmra.mrb[0].mxu0 %v672
        %v717 = vpop.f32.mrb[0].mxu0
        %v718 = vadd.f32 %v540, %v717
        %v719 = vpop.f32.mrb[0].mxu0
        %v720 = vpop.f32.mrb[0].mxu0
        %v721 = vadd.f32 %v540, %v720
        %v722 = vpop.f32.mrb[0].mxu0
        %723 = vmatprep.mubr.bf16.mxu0 0
        %724 = vmatmul.mubr.bf16.gmra.mrb[0].mxu0 %v673
        %v725 = vpop.f32.mrb[0].mxu0
        %v726 = vadd.f32 %v540, %v725
        %v727 = vpop.f32.mrb[0].mxu0
        %v728 = vpop.f32.mrb[0].mxu0
        %v729 = vadd.f32 %v540, %v728
        %v730 = vpop.f32.mrb[0].mxu0
        %731 = vmatprep.mubr.bf16.mxu0 0
        %732 = vmatmul.mubr.bf16.gmra.mrb[0].mxu0 %v674
        %v733 = vpop.f32.mrb[0].mxu0
        %v734 = vadd.f32 %v540, %v733
        %v735 = vpop.f32.mrb[0].mxu0
        %v736 = vpop.f32.mrb[0].mxu0
        %v737 = vadd.f32 %v540, %v736
        %v738 = vpop.f32.mrb[0].mxu0
        %739 = vdwg.mxu0
        %v740 = vtanh.pop %v710
        %v741 = vtanh.pop %v713
        %v742 = vtanh.pop %v718
        %v743 = vtanh.pop %v721
        %v744 = vtanh.pop %v726
        %v745 = vtanh.pop %v729
        %v746 = vtanh.pop %v734
        %v747 = vtanh.pop %v737
        %v748 = vsub.f32 %v655, %v740
        %v749 = vsub.f32 %v656, %v741
        %v750 = vsub.f32 %v657, %v742
        %v751 = vsub.f32 %v658, %v743
        %v752 = vsub.f32 %v659, %v744
        %v753 = vsub.f32 %v660, %v745
        %v754 = vsub.f32 %v661, %v746
        %v755 = vsub.f32 %v662, %v747
        %v756 = vrot.slane %v748, 4
        %v757 = vadd.f32 %v748, %v756
        %v758 = vrot.slane %v757, 2
        %v759 = vadd.f32 %v757, %v758
        %v760 = vrot.slane %v759, 1
        %v761 = vadd.f32 %v759, %v760
        %v762 = vrot.slane %v749, 4
        %v763 = vadd.f32 %v749, %v762
        %v764 = vrot.slane %v763, 2
        %v765 = vadd.f32 %v763, %v764
        %v766 = vrot.slane %v765, 1
        %v767 = vadd.f32 %v765, %v766
        %v768 = vrot.slane %v750, 4
        %v769 = vadd.f32 %v750, %v768
        %v770 = vrot.slane %v769, 2
        %v771 = vadd.f32 %v769, %v770
        %v772 = vrot.slane %v771, 1
        %v773 = vadd.f32 %v771, %v772
        %v774 = vrot.slane %v751, 4
        %v775 = vadd.f32 %v751, %v774
        %v776 = vrot.slane %v775, 2
        %v777 = vadd.f32 %v775, %v776
        %v778 = vrot.slane %v777, 1
        %v779 = vadd.f32 %v777, %v778
        %v780 = vrot.slane %v752, 4
        %v781 = vadd.f32 %v752, %v780
        %v782 = vrot.slane %v781, 2
        %v783 = vadd.f32 %v781, %v782
        %v784 = vrot.slane %v783, 1
        %v785 = vadd.f32 %v783, %v784
        %v786 = vrot.slane %v753, 4
        %v787 = vadd.f32 %v753, %v786
        %v788 = vrot.slane %v787, 2
        %v789 = vadd.f32 %v787, %v788
        %v790 = vrot.slane %v789, 1
        %v791 = vadd.f32 %v789, %v790
        %v792 = vrot.slane %v754, 4
        %v793 = vadd.f32 %v754, %v792
        %v794 = vrot.slane %v793, 2
        %v795 = vadd.f32 %v793, %v794
        %v796 = vrot.slane %v795, 1
        %v797 = vadd.f32 %v795, %v796
        %v798 = vrot.slane %v755, 4
        %v799 = vadd.f32 %v755, %v798
        %v800 = vrot.slane %v799, 2
        %v801 = vadd.f32 %v799, %v800
        %v802 = vrot.slane %v801, 1
        %v803 = vadd.f32 %v801, %v802
        %v804 = vld [vmem:[#allocation8] sm:$0x1]
        %v806 = vlaneseq
        %v807 = vshrl.u32 %v806, 7
        %v808 = vsub.s32 0, %v807
        %v809 = vrot.slane %v804, %v808
        %v811 = vmul.f32 %v761, %v809
        %v812 = vmul.f32 %v767, %v809
        %v813 = vmul.f32 %v773, %v809
        %v814 = vmul.f32 %v779, %v809
        %v815 = vmul.f32 %v785, %v809
        %v816 = vmul.f32 %v791, %v809
        %v817 = vmul.f32 %v797, %v809
        %v818 = vmul.f32 %v803, %v809
        %v827 = vrot.slane %v812, 7
        %vm828 = vcmask 1041409
        %v829 = vsel %vm828, %v827, %v811
        %v830 = vrot.slane %v813, 6
        %vm831 = vcmask 1042434
        %v832 = vsel %vm831, %v830, %v829
        %v833 = vrot.slane %v814, 5
        %vm834 = vcmask 1043459
        %v835 = vsel %vm834, %v833, %v832
        %v836 = vrot.slane %v815, 4
        %vm837 = vcmask 1044484
        %v838 = vsel %vm837, %v836, %v835
        %v839 = vrot.slane %v816, 3
        %vm840 = vcmask 1045509
        %v841 = vsel %vm840, %v839, %v838
        %v842 = vrot.slane %v817, 2
        %vm843 = vcmask 1046534
        %v844 = vsel %vm843, %v842, %v841
        %v845 = vrot.slane %v818, 1
        %vm846 = vcmask 1047559
        %v847 = vsel %vm846, %v845, %v844
        %849 = vadd.xlane.f32.xlu0 %v847
        %v850 = vpop.xlane.xlu0 %849
        %v851 = vmax.f32 %v850, -50.0
        %v852 = vmin.f32 %v851, 50.0
        %v853 = vmul.f32 %v852, 1.442695
        %v854 = vpow.pop %v853
        %v855 = vadd.f32 %v854, 1.0
        %v856 = vrcp.pop %v855
        %v857 = vmul.f32 1.0, %v856
        %v858 = vadd.f32 %v857, 0.0
        %vm859 = vcmask 7168
        %860 = vst.msk [vmem:[%s505] sm:$0xff] %vm859, %v858
        %v861 = vld [vmem:[%s493] sm:$0xff]
        %v862 = vmax.f32 %v852, 0.0
        %v863 = vand.u32 2147483647, %v852
        %v864 = vsub.f32 0.0, %v863
        %v865 = vmul.f32 %v864, 1.442695
        %v866 = vpow.pop %v865
        %v867 = vadd.f32 %v866, 1.0
        %v868 = vlog2.pop %v867
        %v869 = vmul.f32 %v868, 0.6931472
        %v870 = vadd.f32 %v862, %v869
        %v871 = vmul.f32 %v861, %v870
        %v872 = vsub.f32 1.0, %v861
        %v873 = vsub.f32 0.0, %v852
        %v874 = vmax.f32 %v873, 0.0
        %v875 = vand.u32 2147483647, %v873
        %v876 = vsub.f32 0.0, %v875
        %v877 = vmul.f32 %v876, 1.442695
        %v878 = vpow.pop %v877
        %v879 = vadd.f32 %v878, 1.0
        %v880 = vlog2.pop %v879
        %v881 = vmul.f32 %v880, 0.6931472
        %v882 = vadd.f32 %v874, %v881
        %v883 = vmul.f32 %v872, %v882
        %v884 = vadd.f32 %v871, %v883
        %v885 = vsel %vm859, %v884, 0.0
        %886 = vadd.xlane.f32.xlu0 %v885
        %v887 = vpop.xlane.xlu0 %886
        %v888 = vrot.slane %v887, 4
        %v889 = vadd.f32 %v887, %v888
        %v890 = vrot.slane %v889, 2
        %v891 = vadd.f32 %v889, %v890
        %v892 = vrot.slane %v891, 1
        %v893 = vadd.f32 %v891, %v892
        %s894 = vtos %v893
        %vm895 = vcmp.gt.f32.partialorder %v858, 0.5
        %vm896 = vcmp.gt.f32.partialorder %v861, 0.5
        %vm897 = vmxor %vm895, %vm896
        %vm898 = vmxor %vm897, 1
        %v899 = vsel %vm898, 1, 0
        %v900 = vcvt.s32.f32 %v899
        %v901 = vsel %vm859, %v900, 0.0
        %902 = vadd.xlane.f32.xlu0 %v901
        %v903 = vpop.xlane.xlu0 %902
        %v904 = vrot.slane %v903, 4
        %v905 = vadd.f32 %v903, %v904
        %v906 = vrot.slane %v905, 2
        %v907 = vadd.f32 %v905, %v906
        %v908 = vrot.slane %v907, 1
        %v909 = vadd.f32 %v907, %v908
        %s910 = vtos %v909
        %v911 = vld [vmem:[%s501] sm:$0xff]
        %v912 = vld [vmem:[%s497] sm:$0xff]
        %v913 = vsub.f32 %v911, %v912
        %vm914 = vcmask 64512
        %v915 = vsel %vm914, %v913, 0.0
        %916 = vadd.xlane.f32.xlu0 %v915
        %v917 = vpop.xlane.xlu0 %916
        %v918 = vmax.f32 %v917, -50.0
        %v919 = vmin.f32 %v918, 50.0
        %v920 = vmax.f32 %v919, 0.0
        %v921 = vand.u32 2147483647, %v919
        %v922 = vsub.f32 0.0, %v921
        %v923 = vmul.f32 %v922, 1.442695
        %v924 = vpow.pop %v923
        %v925 = vadd.f32 %v924, 1.0
        %v926 = vlog2.pop %v925
        %v927 = vmul.f32 %v926, 0.6931472
        %v928 = vadd.f32 %v920, %v927
        %v929 = vmul.f32 %v861, %v928
        %v930 = vsub.f32 0.0, %v919
        %v931 = vmax.f32 %v930, 0.0
        %v932 = vand.u32 2147483647, %v930
        %v933 = vsub.f32 0.0, %v932
        %v934 = vmul.f32 %v933, 1.442695
        %v935 = vpow.pop %v934
        %v936 = vadd.f32 %v935, 1.0
        %v937 = vlog2.pop %v936
        %v938 = vmul.f32 %v937, 0.6931472
        %v939 = vadd.f32 %v931, %v938
        %v940 = vmul.f32 %v872, %v939
        %v941 = vadd.f32 %v929, %v940
        %v942 = vsel %vm859, %v941, 0.0
        %943 = vadd.xlane.f32.xlu0 %v942
        %v944 = vpop.xlane.xlu0 %943
        %v945 = vrot.slane %v944, 4
        %v946 = vadd.f32 %v944, %v945
        %v947 = vrot.slane %v946, 2
        %v948 = vadd.f32 %v946, %v947
        %v949 = vrot.slane %v948, 1
        %v950 = vadd.f32 %v948, %v949
        %s951 = vtos %v950
        %v952 = vlaneseq
        %v953 = vand.u32 %v952, 127
        %vm954 = vcmp.eq.s32.totalorder %v953, 0
        %vm955 = vcmp.eq.s32.totalorder %v953, 1
        %vm956 = vcmp.eq.s32.totalorder %v953, 2
        %v957 = vstv %s951
        %v958 = vsel %vm956, %v957, 0.0
        %v959 = vstv %s910
        %v960 = vsel %vm955, %v959, %v958
        %v961 = vstv %s894
        %v962 = vsel %vm954, %v961, %v960
        %963 = vst [vmem:[%s481] sm:$0x1] %v962
        %s964 = sand.u32 %s254, 1
        %s965 = scalar_lea.sflag [#allocation4], %s964
        %s966 = sand.u32 %s254, 1
        %s967 = scalar_lea.vmem [#allocation10], %s966
        %p968 = scmp.lt.s32.totalorder %s32, 1
        %s969 = scalar_select %p968, %s32, 1
        %s970 = smul.addr %s969, 8
        %s971 = scalar_lea.vmem %s10, %s970
        // Predicated region
        $region73: #{tpu_custom_call.1} parent=55 // pred_check
          %p972 = pneg %p264
        $region74: #{tpu_custom_call.1} parent=55 // pred_check_branch
          %974 = sbr.rel (%p972) target = $region76
        $region75: #{tpu_custom_call.1} parent=55 // pred_region
          %s976 = ssub.s32 16, 16
          %977 = vsyncadd %s965, %s976
          %s978 = smul.addr %s32, 16
          %s979 = scalar_lea.hbm %s9, %s978
          %s981 = sshll.u32 %s967, 4
          %s982 = int_to_ptr.vmem [resolvable:$true] %s981
          %984 = dma.vmem_to_hbm [thread:$0]  %s982, 16, %s979, %s965
        $region76: #{tpu_custom_call.1} parent=55 // pred_fallthru
          _
        // Predicated region
        $region77: #{tpu_custom_call.1} parent=55 // pred_check
          %p985 = pneg %p290
        $region78: #{tpu_custom_call.1} parent=55 // pred_check_branch
          %987 = sbr.rel (%p985) target = $region80
        $region79: #{tpu_custom_call.1} parent=55 // pred_region
          _
        $region80: #{tpu_custom_call.1} parent=55 // pred_fallthru
          _
      $region56: #{tpu_custom_call.1} parent=5 // pred_fallthru
        _
      %p988 = scmp.le.s32.totalorder 2, %s27
      // Predicated region
      $region81: #{tpu_custom_call.1} parent=5 // pred_check
        %p989 = pneg %p988
      $region82: #{tpu_custom_call.1} parent=5 // pred_check_branch
        %991 = sbr.rel (%p989) target = $region84
      $region83: #{tpu_custom_call.1} parent=5 // pred_region
        %s992 = ssub.s32 %s27, 2
        // Predicated region
        $region85: #{tpu_custom_call.1} parent=83 // pred_check
          %p993 = pneg %p270
        $region86: #{tpu_custom_call.1} parent=83 // pred_check_branch
          %995 = sbr.rel (%p993) target = $region88
        $region87: #{tpu_custom_call.1} parent=83 // pred_region
          %s996 = sand.u32 %s255, 1
          %s997 = scalar_lea.sflag [#allocation4], %s996
          %s998 = sand.u32 %s255, 1
          %s999 = scalar_lea.vmem [#allocation10], %s998
          %1000 = dma.done %s997, 16
        $region88: #{tpu_custom_call.1} parent=83 // pred_fallthru
          _
        // Predicated region
        $region89: #{tpu_custom_call.1} parent=83 // pred_check
          %p1001 = pneg %p296
        $region90: #{tpu_custom_call.1} parent=83 // pred_check_branch
          %1003 = sbr.rel (%p1001) target = $region92
        $region91: #{tpu_custom_call.1} parent=83 // pred_region
          %p1004 = scmp.lt.s32.totalorder %s33, 1
          %s1005 = scalar_select %p1004, %s33, 1
          %s1006 = smul.addr %s1005, 8
          %s1007 = scalar_lea.vmem %s10, %s1006
        $region92: #{tpu_custom_call.1} parent=83 // pred_fallthru
          _
      $region84: #{tpu_custom_call.1} parent=5 // pred_fallthru
        _
    $region6: #{tpu_custom_call.1} parent=1 // loop_footer
      %s31 = sadd.s32 1, %s27
    $region7: #{tpu_custom_call.1} parent=1 // loop_footer_branch
      %26 = sbr.rel target = $region3
    $region8: #{tpu_custom_call.1} parent=1 // loop_exit
      _
    %1008 = vsyncpa [#allocation3], 1
    %s1009 = scalar_lea.sflag [#allocation3], 1
    %1010 = vsyncpa %s1009, 1
    %1011 = vsyncpa [#allocation6], 1
    %s1012 = scalar_lea.sflag [#allocation6], 1
    %1013 = vsyncpa %s1012, 1
    %1014 = vsyncpa [#allocation9], 1
    %1015 = vsyncpa [#allocation4], 1
    %s1016 = scalar_lea.sflag [#allocation4], 1
    %1017 = vsyncpa %s1016, 1

</llo_original>
